<compile_context>
chip_gen: v7x
topology: tpu7x:2x2x1
jax: 0.10.0
libtpu: 0.0.40
codegen_flags: <defaults>
</compile_context>

<pallas_src>
import functools

import jax
import jax.numpy as jnp
from jax.experimental import pallas as pl
from jax.experimental.pallas import tpu as pltpu


def _round_up(x, m):
    return ((x + m - 1) // m) * m


def _miou_kernel(logits_ref, target_ref, inter_ref, union_ref, *,
                 hw_valid, hw_padded):
    # logits_ref : (1, C, R, 128)   native dtype (f32 / bf16 / ...)
    # target_ref : (1, 1, R, 128)   int8 / int32 class ids (padding = C)
    # inter_ref  : (1, 1, C, 1, 128) f32 lane-partial accumulator (resident)
    # union_ref  : (1, 1, C, 1, 128) f32 lane-partial accumulator (resident)
    h = pl.program_id(2)

    @pl.when(h == 0)
    def _init():
        inter_ref[...] = jnp.zeros_like(inter_ref)
        union_ref[...] = jnp.zeros_like(union_ref)

    C = logits_ref.shape[1]
    R = logits_ref.shape[2]

    t = target_ref[0, 0].astype(jnp.int32)            # (R, 128)

    # Upcast once per class slab; everything below is dense (R,128) vreg math.
    xs = [logits_ref[0, c].astype(jnp.float32) for c in range(C)]

    # Softmax over the class axis: per-pixel max / sum are plain vreg
    # max/adds across the C slabs (no cross-lane work), one exp per element
    # (dense -- no sublane padding), ONE reciprocal per pixel.
    m = xs[0]
    for c in range(1, C):
        m = jnp.maximum(m, xs[c])

    es = []
    denom = None
    for c in range(C):
        e_c = jnp.exp(xs[c] - m)
        es.append(e_c)
        denom = e_c if denom is None else denom + e_c

    inv = pl.reciprocal(denom)                         # (R, 128), exact

    if hw_padded != hw_valid:
        # Zero the per-pixel reciprocal on padded pixels: p becomes 0 there,
        # and since target is padded with the out-of-range class C the
        # one-hot side is already 0 -> padding contributes nothing.
        tile = pl.program_id(0) * pl.num_programs(2) + h
        rows = jax.lax.broadcasted_iota(jnp.int32, (R, 128), 0)
        lanes = jax.lax.broadcasted_iota(jnp.int32, (R, 128), 1)
        flat = (tile * R + rows) * 128 + lanes
        inv = jnp.where(flat < hw_valid, inv, 0.0)

    for c in range(C):
        p_c = es[c] * inv                              # softmax prob of class c
        mask_c = (t == c)                              # one-hot as a predicate
        inter_c = jnp.where(mask_c, p_c, 0.0)          # p * onehot
        union_c = jnp.where(mask_c, 1.0, p_c)          # p + onehot - p*onehot
        # Sublane-reduce to lane partials (1, 128); accumulator stores are
        # lane-dense.  Final 128-lane reduce happens in the JAX glue.
        inter_ref[0, 0, c] += jnp.sum(inter_c, axis=0, keepdims=True)
        union_ref[0, 0, c] += jnp.sum(union_c, axis=0, keepdims=True)


def mm_iou_loss(inputs, target, n_classes, *, tile_rows=None, num_splits=None):
    """inputs: (N, C, H, W) float logits (any float dtype); target: (N, H, W) int."""
    N, C, H, W = inputs.shape
    assert C == n_classes
    HW = H * W

    # --- VMEM budget scaled to the actual part (v5e/v6e: 128 MiB, v7x: 64 MiB).
    try:
        vmem_cap = int(pltpu.get_tpu_info().vmem_capacity_bytes)
    except Exception:
        vmem_cap = 64 * 1024 * 1024                    # conservative fallback
    vmem_limit = min(vmem_cap // 2, 64 * 1024 * 1024)
    budget = vmem_limit // 2

    in_itemsize = jnp.dtype(inputs.dtype).itemsize
    # Stream target as int8 when possible (class ids + the pad value C fit).
    tgt_dtype = jnp.int8 if n_classes <= 120 else jnp.int32
    tgt_itemsize = jnp.dtype(tgt_dtype).itemsize

    rows_needed = -(-HW // 128)                        # ceil(HW / 128)

    if tile_rows is None:
        # Per-row (= 128 px) VMEM bytes: double-buffered logits + target
        # blocks, plus ~(2C + 6) live full-width f32 intermediates (xs, es,
        # m/denom/inv, per-class temporaries).  Spatial is on the vreg dims,
        # so there is no C->8 sublane padding to account for.
        per_row = 128 * (2 * C * in_itemsize + 2 * tgt_itemsize + (2 * C + 6) * 4)
        tile_rows = budget // per_row
    tile_rows = int(tile_rows)
    # Cap: past ~128K px/step the grid overhead is long amortised; never
    # exceed the (rounded-up) problem size; keep a multiple of 32 rows so
    # int8 / bf16 sublane packing stays tile-aligned.
    tile_rows = min(tile_rows, _round_up(rows_needed, 32), 1024)
    tile_rows = max(32, (tile_rows // 32) * 32)

    n_tiles = -(-rows_needed // tile_rows)
    if num_splits is None:
        num_splits = 2 if n_tiles >= 2 else 1          # feed both v7x cores
    n_per_split = -(-n_tiles // num_splits)
    rows_pad = num_splits * n_per_split * tile_rows
    hw_pad = rows_pad * 128

    # Native-dtype streaming: no wrapper-side f32 copy of the logits.
    logits = inputs.reshape(N, C, HW)
    tgt = target.reshape(N, 1, HW).astype(tgt_dtype)
    if hw_pad != HW:
        logits = jnp.pad(logits, ((0, 0), (0, 0), (0, hw_pad - HW)))
        # Pad target with the out-of-range class C -> one-hot is zero there.
        tgt = jnp.pad(tgt, ((0, 0), (0, 0), (0, hw_pad - HW)),
                      constant_values=n_classes)
    logits = logits.reshape(N, C, rows_pad, 128)       # free metadata reshape
    tgt = tgt.reshape(N, 1, rows_pad, 128)

    kernel = functools.partial(_miou_kernel, hw_valid=HW, hw_padded=hw_pad)

    inter, union = pl.pallas_call(
        kernel,
        out_shape=(
            jax.ShapeDtypeStruct((num_splits, N, C, 1, 128), jnp.float32),
            jax.ShapeDtypeStruct((num_splits, N, C, 1, 128), jnp.float32),
        ),
        grid_spec=pltpu.PrefetchScalarGridSpec(
            num_scalar_prefetch=0,
            # (core-split, batch, spatial tiles); reduction axis last.
            grid=(num_splits, N, n_per_split),
            in_specs=[
                pl.BlockSpec((1, C, tile_rows, 128),
                             lambda s, n, h: (n, 0, s * n_per_split + h, 0)),
                pl.BlockSpec((1, 1, tile_rows, 128),
                             lambda s, n, h: (n, 0, s * n_per_split + h, 0)),
            ],
            out_specs=[
                # Block index constant along the spatial axis -> the output
                # block is the VMEM accumulator, written back once per (s, n).
                pl.BlockSpec((1, 1, C, 1, 128), lambda s, n, h: (s, n, 0, 0, 0)),
                pl.BlockSpec((1, 1, C, 1, 128), lambda s, n, h: (s, n, 0, 0, 0)),
            ],
        ),
        compiler_params=pltpu.CompilerParams(
            dimension_semantics=("parallel", "parallel", "arbitrary"),
            vmem_limit_bytes=int(vmem_limit),
        ),
    )(logits, tgt)

    # Tiny JAX glue: fold core-split partials + 128 lane partials, then the
    # iou / min / mean scalars.
    inter_nc = inter.sum(axis=(0, 3, 4))               # (N, C)
    union_nc = union.sum(axis=(0, 3, 4))               # (N, C)
    iou = inter_nc / (union_nc + 1e-8)
    return -jnp.min(iou) - jnp.mean(iou)


def _mm_iou_loss_ref(inputs, target, n_classes):
    """Pure-JAX reference (mirrors the PyTorch module)."""
    N, C, H, W = inputs.shape
    p = jax.nn.softmax(inputs.astype(jnp.float32), axis=1)
    one_hot = jax.nn.one_hot(target, n_classes, axis=1, dtype=jnp.float32)
    inter = (p * one_hot).reshape(N, C, -1).sum(axis=2)
    union = (p + one_hot - p * one_hot).reshape(N, C, -1).sum(axis=2)
    iou = inter / (union + 1e-8)
    return -jnp.min(iou) - jnp.mean(iou)


if __name__ == "__main__":
    key = jax.random.PRNGKey(0)
    k1, k2, k3, k4 = jax.random.split(key, 4)

    # Case 1: small f32 logits (N=2, C=4, 16x16).  Single tile, padded /
    # masked remainder (256 valid px inside a 32-row tile).
    N, C, H, W = 2, 4, 16, 16
    inputs = jax.random.normal(k1, (N, C, H, W), dtype=jnp.float32)
    target = jax.random.randint(k2, (N, H, W), minval=0, maxval=C, dtype=jnp.int32)
    loss = mm_iou_loss(inputs, target, n_classes=C)
    jax.block_until_ready(loss)
    ref = _mm_iou_loss_ref(inputs, target, n_classes=C)
    assert jnp.allclose(loss, ref, rtol=1e-5, atol=1e-6), (loss, ref)

    # Case 2: bf16 logits streamed natively (upcast in VMEM), int8 target,
    # H*W not a multiple of 128, multiple spatial tiles -> exercises the
    # resident-accumulator path and the 2-way core-split grid axis.
    H2, W2 = 72, 72
    inputs2 = jax.random.normal(k3, (N, C, H2, W2), dtype=jnp.bfloat16)
    target2 = jax.random.randint(k4, (N, H2, W2), minval=0, maxval=C, dtype=jnp.int32)
    loss2 = mm_iou_loss(inputs2, target2, n_classes=C, tile_rows=32)
    jax.block_until_ready(loss2)
    ref2 = _mm_iou_loss_ref(inputs2.astype(jnp.float32), target2, n_classes=C)
    assert jnp.allclose(loss2, ref2, rtol=1e-4, atol=1e-4), (loss2, ref2)

    print("KERNEL_OK")
</pallas_src>

<mosaic_0001>
module attributes {stable_mosaic.version = 11 : i64} {
  func.func @_miou_kernel(%arg0: i32, %arg1: i32, %arg2: i32, %arg3: memref<1x4x32x128xf32, #tpu.memory_space<vmem>>, %arg4: memref<1x1x32x128xi8, #tpu.memory_space<vmem>>, %arg5: memref<1x1x4x1x128xf32, #tpu.memory_space<vmem>>, %arg6: memref<1x1x4x1x128xf32, #tpu.memory_space<vmem>>) attributes {dimension_semantics = [#tpu.dimension_semantics<parallel>, #tpu.dimension_semantics<parallel>, #tpu.dimension_semantics<arbitrary>], iteration_bounds = array<i64: 1, 2, 1>, scalar_prefetch = 0 : i64, scratch_operands = 0 : i64, tpu.core_type = #tpu.core_type<tc>, window_params = [{transform_indices = @transform_0, window_bounds = array<i64: 1, 4, 32, 128>}, {transform_indices = @transform_1, window_bounds = array<i64: 1, 1, 32, 128>}, {transform_indices = @transform_2, window_bounds = array<i64: 1, 1, 4, 1, 128>}, {transform_indices = @transform_3, window_bounds = array<i64: 1, 1, 4, 1, 128>}]} {
    %c0_i32 = arith.constant 0 : i32
    %0 = arith.cmpi eq, %arg2, %c0_i32 : i32
    %1 = arith.extui %0 : i1 to i32
    %c0_i32_0 = arith.constant 0 : i32
    %2 = arith.cmpi ne, %1, %c0_i32_0 : i32
    scf.if %2 {
      %cst_115 = arith.constant 0.000000e+00 : f32
      %135 = vector.broadcast %cst_115 : f32 to vector<1x1x4x1x128xf32>
      %c0_116 = arith.constant 0 : index
      %c0_117 = arith.constant 0 : index
      %c0_118 = arith.constant 0 : index
      %c0_119 = arith.constant 0 : index
      %c0_120 = arith.constant 0 : index
      %136 = vector.load %arg5[%c0_116, %c0_117, %c0_118, %c0_119, %c0_120] : memref<1x1x4x1x128xf32, #tpu.memory_space<vmem>>, vector<1x1x4x1x128xf32>
      tpu.vector_store %arg5[%c0_116, %c0_117, %c0_118, %c0_119, %c0_120], %135 {strides = array<i32>} : memref<1x1x4x1x128xf32, #tpu.memory_space<vmem>>, vector<1x1x4x1x128xf32>,
      %cst_121 = arith.constant 0.000000e+00 : f32
      %137 = vector.broadcast %cst_121 : f32 to vector<1x1x4x1x128xf32>
      %c0_122 = arith.constant 0 : index
      %c0_123 = arith.constant 0 : index
      %c0_124 = arith.constant 0 : index
      %c0_125 = arith.constant 0 : index
      %c0_126 = arith.constant 0 : index
      %138 = vector.load %arg6[%c0_122, %c0_123, %c0_124, %c0_125, %c0_126] : memref<1x1x4x1x128xf32, #tpu.memory_space<vmem>>, vector<1x1x4x1x128xf32>
      tpu.vector_store %arg6[%c0_122, %c0_123, %c0_124, %c0_125, %c0_126], %137 {strides = array<i32>} : memref<1x1x4x1x128xf32, #tpu.memory_space<vmem>>, vector<1x1x4x1x128xf32>,
    } else {
    }
    %c0 = arith.constant 0 : index
    %c0_1 = arith.constant 0 : index
    %c0_2 = arith.constant 0 : index
    %c0_3 = arith.constant 0 : index
    %3 = vector.load %arg4[%c0, %c0_1, %c0_2, %c0_3] : memref<1x1x32x128xi8, #tpu.memory_space<vmem>>, vector<1x1x32x128xi8>
    %4 = vector.shape_cast %3 : vector<1x1x32x128xi8> to vector<32x128xi8>
    %5 = arith.extsi %4 : vector<32x128xi8> to vector<32x128xi32>
    %c0_4 = arith.constant 0 : index
    %c0_5 = arith.constant 0 : index
    %c0_6 = arith.constant 0 : index
    %c0_7 = arith.constant 0 : index
    %6 = vector.load %arg3[%c0_4, %c0_5, %c0_6, %c0_7] : memref<1x4x32x128xf32, #tpu.memory_space<vmem>>, vector<1x1x32x128xf32>
    %7 = vector.shape_cast %6 : vector<1x1x32x128xf32> to vector<32x128xf32>
    %c0_8 = arith.constant 0 : index
    %c1 = arith.constant 1 : index
    %c0_9 = arith.constant 0 : index
    %c0_10 = arith.constant 0 : index
    %8 = vector.load %arg3[%c0_8, %c1, %c0_9, %c0_10] : memref<1x4x32x128xf32, #tpu.memory_space<vmem>>, vector<1x1x32x128xf32>
    %9 = vector.shape_cast %8 : vector<1x1x32x128xf32> to vector<32x128xf32>
    %c0_11 = arith.constant 0 : index
    %c2 = arith.constant 2 : index
    %c0_12 = arith.constant 0 : index
    %c0_13 = arith.constant 0 : index
    %10 = vector.load %arg3[%c0_11, %c2, %c0_12, %c0_13] : memref<1x4x32x128xf32, #tpu.memory_space<vmem>>, vector<1x1x32x128xf32>
    %11 = vector.shape_cast %10 : vector<1x1x32x128xf32> to vector<32x128xf32>
    %c0_14 = arith.constant 0 : index
    %c3 = arith.constant 3 : index
    %c0_15 = arith.constant 0 : index
    %c0_16 = arith.constant 0 : index
    %12 = vector.load %arg3[%c0_14, %c3, %c0_15, %c0_16] : memref<1x4x32x128xf32, #tpu.memory_space<vmem>>, vector<1x1x32x128xf32>
    %13 = vector.shape_cast %12 : vector<1x1x32x128xf32> to vector<32x128xf32>
    %14 = arith.maximumf %7, %9 : vector<32x128xf32>
    %15 = arith.maximumf %14, %11 : vector<32x128xf32>
    %16 = arith.maximumf %15, %13 : vector<32x128xf32>
    %17 = arith.subf %7, %16 : vector<32x128xf32>
    %18 = math.exp %17 : vector<32x128xf32>
    %19 = arith.subf %9, %16 : vector<32x128xf32>
    %20 = math.exp %19 : vector<32x128xf32>
    %21 = arith.addf %18, %20 : vector<32x128xf32>
    %22 = arith.subf %11, %16 : vector<32x128xf32>
    %23 = math.exp %22 : vector<32x128xf32>
    %24 = arith.addf %21, %23 : vector<32x128xf32>
    %25 = arith.subf %13, %16 : vector<32x128xf32>
    %26 = math.exp %25 : vector<32x128xf32>
    %27 = arith.addf %24, %26 : vector<32x128xf32>
    %28 = tpu.reciprocal %27 : vector<32x128xf32> -> vector<32x128xf32>
    %c1_i32 = arith.constant 1 : i32
    %29 = arith.muli %arg0, %c1_i32 : i32
    %30 = arith.addi %29, %arg2 : i32
    %31 = tpu.iota {dimensions = array<i32: 0>} : vector<32x128xi32>
    %32 = tpu.iota {dimensions = array<i32: 1>} : vector<32x128xi32>
    %c32_i32 = arith.constant 32 : i32
    %33 = arith.muli %30, %c32_i32 : i32
    %34 = vector.broadcast %33 : i32 to vector<32x128xi32>
    %35 = arith.addi %34, %31 : vector<32x128xi32>
    %c128_i32 = arith.constant 128 : i32
    %36 = vector.broadcast %c128_i32 : i32 to vector<32x128xi32>
    %37 = arith.muli %35, %36 : vector<32x128xi32>
    %38 = arith.addi %37, %32 : vector<32x128xi32>
    %c256_i32 = arith.constant 256 : i32
    %39 = vector.broadcast %c256_i32 : i32 to vector<32x128xi32>
    %40 = arith.cmpi slt, %38, %39 : vector<32x128xi32>
    %cst = arith.constant 0.000000e+00 : f32
    %41 = vector.broadcast %cst : f32 to vector<32x128xf32>
    %42 = arith.select %40, %28, %41 : vector<32x128xi1>, vector<32x128xf32>
    %43 = arith.mulf %18, %42 : vector<32x128xf32>
    %c0_i32_17 = arith.constant 0 : i32
    %44 = vector.broadcast %c0_i32_17 : i32 to vector<32x128xi32>
    %45 = arith.cmpi eq, %5, %44 : vector<32x128xi32>
    %cst_18 = arith.constant 0.000000e+00 : f32
    %46 = vector.broadcast %cst_18 : f32 to vector<32x128xf32>
    %47 = arith.select %45, %43, %46 : vector<32x128xi1>, vector<32x128xf32>
    %cst_19 = arith.constant 1.000000e+00 : f32
    %48 = vector.broadcast %cst_19 : f32 to vector<32x128xf32>
    %49 = arith.select %45, %48, %43 : vector<32x128xi1>, vector<32x128xf32>
    %c0_20 = arith.constant 0 : index
    %c0_21 = arith.constant 0 : index
    %c0_22 = arith.constant 0 : index
    %c0_23 = arith.constant 0 : index
    %c0_24 = arith.constant 0 : index
    %50 = vector.load %arg5[%c0_20, %c0_21, %c0_22, %c0_23, %c0_24] : memref<1x1x4x1x128xf32, #tpu.memory_space<vmem>>, vector<1x1x1x1x128xf32>
    %51 = vector.shape_cast %50 : vector<1x1x1x1x128xf32> to vector<1x128xf32>
    %cst_25 = arith.constant dense<0.000000e+00> : vector<128xf32>
    %52 = vector.multi_reduction <add>, %47, %cst_25 [0] : vector<32x128xf32> to vector<128xf32>
    %53 = vector.shape_cast %52 : vector<128xf32> to vector<1x128xf32>
    %54 = arith.addf %51, %53 : vector<1x128xf32>
    %c0_26 = arith.constant 0 : index
    %c0_27 = arith.constant 0 : index
    %c0_28 = arith.constant 0 : index
    %c0_29 = arith.constant 0 : index
    %c0_30 = arith.constant 0 : index
    %55 = vector.load %arg5[%c0_26, %c0_27, %c0_28, %c0_29, %c0_30] : memref<1x1x4x1x128xf32, #tpu.memory_space<vmem>>, vector<1x1x1x1x128xf32>
    %56 = vector.shape_cast %55 : vector<1x1x1x1x128xf32> to vector<1x128xf32>
    %57 = vector.shape_cast %54 : vector<1x128xf32> to vector<1x1x1x1x128xf32>
    tpu.vector_store %arg5[%c0_26, %c0_27, %c0_28, %c0_29, %c0_30], %57 {strides = array<i32>} : memref<1x1x4x1x128xf32, #tpu.memory_space<vmem>>, vector<1x1x1x1x128xf32>,
    %c0_31 = arith.constant 0 : index
    %c0_32 = arith.constant 0 : index
    %c0_33 = arith.constant 0 : index
    %c0_34 = arith.constant 0 : index
    %c0_35 = arith.constant 0 : index
    %58 = vector.load %arg6[%c0_31, %c0_32, %c0_33, %c0_34, %c0_35] : memref<1x1x4x1x128xf32, #tpu.memory_space<vmem>>, vector<1x1x1x1x128xf32>
    %59 = vector.shape_cast %58 : vector<1x1x1x1x128xf32> to vector<1x128xf32>
    %cst_36 = arith.constant dense<0.000000e+00> : vector<128xf32>
    %60 = vector.multi_reduction <add>, %49, %cst_36 [0] : vector<32x128xf32> to vector<128xf32>
    %61 = vector.shape_cast %60 : vector<128xf32> to vector<1x128xf32>
    %62 = arith.addf %59, %61 : vector<1x128xf32>
    %c0_37 = arith.constant 0 : index
    %c0_38 = arith.constant 0 : index
    %c0_39 = arith.constant 0 : index
    %c0_40 = arith.constant 0 : index
    %c0_41 = arith.constant 0 : index
    %63 = vector.load %arg6[%c0_37, %c0_38, %c0_39, %c0_40, %c0_41] : memref<1x1x4x1x128xf32, #tpu.memory_space<vmem>>, vector<1x1x1x1x128xf32>
    %64 = vector.shape_cast %63 : vector<1x1x1x1x128xf32> to vector<1x128xf32>
    %65 = vector.shape_cast %62 : vector<1x128xf32> to vector<1x1x1x1x128xf32>
    tpu.vector_store %arg6[%c0_37, %c0_38, %c0_39, %c0_40, %c0_41], %65 {strides = array<i32>} : memref<1x1x4x1x128xf32, #tpu.memory_space<vmem>>, vector<1x1x1x1x128xf32>,
    %66 = arith.mulf %20, %42 : vector<32x128xf32>
    %c1_i32_42 = arith.constant 1 : i32
    %67 = vector.broadcast %c1_i32_42 : i32 to vector<32x128xi32>
    %68 = arith.cmpi eq, %5, %67 : vector<32x128xi32>
    %cst_43 = arith.constant 0.000000e+00 : f32
    %69 = vector.broadcast %cst_43 : f32 to vector<32x128xf32>
    %70 = arith.select %68, %66, %69 : vector<32x128xi1>, vector<32x128xf32>
    %cst_44 = arith.constant 1.000000e+00 : f32
    %71 = vector.broadcast %cst_44 : f32 to vector<32x128xf32>
    %72 = arith.select %68, %71, %66 : vector<32x128xi1>, vector<32x128xf32>
    %c0_45 = arith.constant 0 : index
    %c0_46 = arith.constant 0 : index
    %c1_47 = arith.constant 1 : index
    %c0_48 = arith.constant 0 : index
    %c0_49 = arith.constant 0 : index
    %73 = vector.load %arg5[%c0_45, %c0_46, %c1_47, %c0_48, %c0_49] : memref<1x1x4x1x128xf32, #tpu.memory_space<vmem>>, vector<1x1x1x1x128xf32>
    %74 = vector.shape_cast %73 : vector<1x1x1x1x128xf32> to vector<1x128xf32>
    %cst_50 = arith.constant dense<0.000000e+00> : vector<128xf32>
    %75 = vector.multi_reduction <add>, %70, %cst_50 [0] : vector<32x128xf32> to vector<128xf32>
    %76 = vector.shape_cast %75 : vector<128xf32> to vector<1x128xf32>
    %77 = arith.addf %74, %76 : vector<1x128xf32>
    %c0_51 = arith.constant 0 : index
    %c0_52 = arith.constant 0 : index
    %c1_53 = arith.constant 1 : index
    %c0_54 = arith.constant 0 : index
    %c0_55 = arith.constant 0 : index
    %78 = vector.load %arg5[%c0_51, %c0_52, %c1_53, %c0_54, %c0_55] : memref<1x1x4x1x128xf32, #tpu.memory_space<vmem>>, vector<1x1x1x1x128xf32>
    %79 = vector.shape_cast %78 : vector<1x1x1x1x128xf32> to vector<1x128xf32>
    %80 = vector.shape_cast %77 : vector<1x128xf32> to vector<1x1x1x1x128xf32>
    tpu.vector_store %arg5[%c0_51, %c0_52, %c1_53, %c0_54, %c0_55], %80 {strides = array<i32>} : memref<1x1x4x1x128xf32, #tpu.memory_space<vmem>>, vector<1x1x1x1x128xf32>,
    %c0_56 = arith.constant 0 : index
    %c0_57 = arith.constant 0 : index
    %c1_58 = arith.constant 1 : index
    %c0_59 = arith.constant 0 : index
    %c0_60 = arith.constant 0 : index
    %81 = vector.load %arg6[%c0_56, %c0_57, %c1_58, %c0_59, %c0_60] : memref<1x1x4x1x128xf32, #tpu.memory_space<vmem>>, vector<1x1x1x1x128xf32>
    %82 = vector.shape_cast %81 : vector<1x1x1x1x128xf32> to vector<1x128xf32>
    %cst_61 = arith.constant dense<0.000000e+00> : vector<128xf32>
    %83 = vector.multi_reduction <add>, %72, %cst_61 [0] : vector<32x128xf32> to vector<128xf32>
    %84 = vector.shape_cast %83 : vector<128xf32> to vector<1x128xf32>
    %85 = arith.addf %82, %84 : vector<1x128xf32>
    %c0_62 = arith.constant 0 : index
    %c0_63 = arith.constant 0 : index
    %c1_64 = arith.constant 1 : index
    %c0_65 = arith.constant 0 : index
    %c0_66 = arith.constant 0 : index
    %86 = vector.load %arg6[%c0_62, %c0_63, %c1_64, %c0_65, %c0_66] : memref<1x1x4x1x128xf32, #tpu.memory_space<vmem>>, vector<1x1x1x1x128xf32>
    %87 = vector.shape_cast %86 : vector<1x1x1x1x128xf32> to vector<1x128xf32>
    %88 = vector.shape_cast %85 : vector<1x128xf32> to vector<1x1x1x1x128xf32>
    tpu.vector_store %arg6[%c0_62, %c0_63, %c1_64, %c0_65, %c0_66], %88 {strides = array<i32>} : memref<1x1x4x1x128xf32, #tpu.memory_space<vmem>>, vector<1x1x1x1x128xf32>,
    %89 = arith.mulf %23, %42 : vector<32x128xf32>
    %c2_i32 = arith.constant 2 : i32
    %90 = vector.broadcast %c2_i32 : i32 to vector<32x128xi32>
    %91 = arith.cmpi eq, %5, %90 : vector<32x128xi32>
    %cst_67 = arith.constant 0.000000e+00 : f32
    %92 = vector.broadcast %cst_67 : f32 to vector<32x128xf32>
    %93 = arith.select %91, %89, %92 : vector<32x128xi1>, vector<32x128xf32>
    %cst_68 = arith.constant 1.000000e+00 : f32
    %94 = vector.broadcast %cst_68 : f32 to vector<32x128xf32>
    %95 = arith.select %91, %94, %89 : vector<32x128xi1>, vector<32x128xf32>
    %c0_69 = arith.constant 0 : index
    %c0_70 = arith.constant 0 : index
    %c2_71 = arith.constant 2 : index
    %c0_72 = arith.constant 0 : index
    %c0_73 = arith.constant 0 : index
    %96 = vector.load %arg5[%c0_69, %c0_70, %c2_71, %c0_72, %c0_73] : memref<1x1x4x1x128xf32, #tpu.memory_space<vmem>>, vector<1x1x1x1x128xf32>
    %97 = vector.shape_cast %96 : vector<1x1x1x1x128xf32> to vector<1x128xf32>
    %cst_74 = arith.constant dense<0.000000e+00> : vector<128xf32>
    %98 = vector.multi_reduction <add>, %93, %cst_74 [0] : vector<32x128xf32> to vector<128xf32>
    %99 = vector.shape_cast %98 : vector<128xf32> to vector<1x128xf32>
    %100 = arith.addf %97, %99 : vector<1x128xf32>
    %c0_75 = arith.constant 0 : index
    %c0_76 = arith.constant 0 : index
    %c2_77 = arith.constant 2 : index
    %c0_78 = arith.constant 0 : index
    %c0_79 = arith.constant 0 : index
    %101 = vector.load %arg5[%c0_75, %c0_76, %c2_77, %c0_78, %c0_79] : memref<1x1x4x1x128xf32, #tpu.memory_space<vmem>>, vector<1x1x1x1x128xf32>
    %102 = vector.shape_cast %101 : vector<1x1x1x1x128xf32> to vector<1x128xf32>
    %103 = vector.shape_cast %100 : vector<1x128xf32> to vector<1x1x1x1x128xf32>
    tpu.vector_store %arg5[%c0_75, %c0_76, %c2_77, %c0_78, %c0_79], %103 {strides = array<i32>} : memref<1x1x4x1x128xf32, #tpu.memory_space<vmem>>, vector<1x1x1x1x128xf32>,
    %c0_80 = arith.constant 0 : index
    %c0_81 = arith.constant 0 : index
    %c2_82 = arith.constant 2 : index
    %c0_83 = arith.constant 0 : index
    %c0_84 = arith.constant 0 : index
    %104 = vector.load %arg6[%c0_80, %c0_81, %c2_82, %c0_83, %c0_84] : memref<1x1x4x1x128xf32, #tpu.memory_space<vmem>>, vector<1x1x1x1x128xf32>
    %105 = vector.shape_cast %104 : vector<1x1x1x1x128xf32> to vector<1x128xf32>
    %cst_85 = arith.constant dense<0.000000e+00> : vector<128xf32>
    %106 = vector.multi_reduction <add>, %95, %cst_85 [0] : vector<32x128xf32> to vector<128xf32>
    %107 = vector.shape_cast %106 : vector<128xf32> to vector<1x128xf32>
    %108 = arith.addf %105, %107 : vector<1x128xf32>
    %c0_86 = arith.constant 0 : index
    %c0_87 = arith.constant 0 : index
    %c2_88 = arith.constant 2 : index
    %c0_89 = arith.constant 0 : index
    %c0_90 = arith.constant 0 : index
    %109 = vector.load %arg6[%c0_86, %c0_87, %c2_88, %c0_89, %c0_90] : memref<1x1x4x1x128xf32, #tpu.memory_space<vmem>>, vector<1x1x1x1x128xf32>
    %110 = vector.shape_cast %109 : vector<1x1x1x1x128xf32> to vector<1x128xf32>
    %111 = vector.shape_cast %108 : vector<1x128xf32> to vector<1x1x1x1x128xf32>
    tpu.vector_store %arg6[%c0_86, %c0_87, %c2_88, %c0_89, %c0_90], %111 {strides = array<i32>} : memref<1x1x4x1x128xf32, #tpu.memory_space<vmem>>, vector<1x1x1x1x128xf32>,
    %112 = arith.mulf %26, %42 : vector<32x128xf32>
    %c3_i32 = arith.constant 3 : i32
    %113 = vector.broadcast %c3_i32 : i32 to vector<32x128xi32>
    %114 = arith.cmpi eq, %5, %113 : vector<32x128xi32>
    %cst_91 = arith.constant 0.000000e+00 : f32
    %115 = vector.broadcast %cst_91 : f32 to vector<32x128xf32>
    %116 = arith.select %114, %112, %115 : vector<32x128xi1>, vector<32x128xf32>
    %cst_92 = arith.constant 1.000000e+00 : f32
    %117 = vector.broadcast %cst_92 : f32 to vector<32x128xf32>
    %118 = arith.select %114, %117, %112 : vector<32x128xi1>, vector<32x128xf32>
    %c0_93 = arith.constant 0 : index
    %c0_94 = arith.constant 0 : index
    %c3_95 = arith.constant 3 : index
    %c0_96 = arith.constant 0 : index
    %c0_97 = arith.constant 0 : index
    %119 = vector.load %arg5[%c0_93, %c0_94, %c3_95, %c0_96, %c0_97] : memref<1x1x4x1x128xf32, #tpu.memory_space<vmem>>, vector<1x1x1x1x128xf32>
    %120 = vector.shape_cast %119 : vector<1x1x1x1x128xf32> to vector<1x128xf32>
    %cst_98 = arith.constant dense<0.000000e+00> : vector<128xf32>
    %121 = vector.multi_reduction <add>, %116, %cst_98 [0] : vector<32x128xf32> to vector<128xf32>
    %122 = vector.shape_cast %121 : vector<128xf32> to vector<1x128xf32>
    %123 = arith.addf %120, %122 : vector<1x128xf32>
    %c0_99 = arith.constant 0 : index
    %c0_100 = arith.constant 0 : index
    %c3_101 = arith.constant 3 : index
    %c0_102 = arith.constant 0 : index
    %c0_103 = arith.constant 0 : index
    %124 = vector.load %arg5[%c0_99, %c0_100, %c3_101, %c0_102, %c0_103] : memref<1x1x4x1x128xf32, #tpu.memory_space<vmem>>, vector<1x1x1x1x128xf32>
    %125 = vector.shape_cast %124 : vector<1x1x1x1x128xf32> to vector<1x128xf32>
    %126 = vector.shape_cast %123 : vector<1x128xf32> to vector<1x1x1x1x128xf32>
    tpu.vector_store %arg5[%c0_99, %c0_100, %c3_101, %c0_102, %c0_103], %126 {strides = array<i32>} : memref<1x1x4x1x128xf32, #tpu.memory_space<vmem>>, vector<1x1x1x1x128xf32>,
    %c0_104 = arith.constant 0 : index
    %c0_105 = arith.constant 0 : index
    %c3_106 = arith.constant 3 : index
    %c0_107 = arith.constant 0 : index
    %c0_108 = arith.constant 0 : index
    %127 = vector.load %arg6[%c0_104, %c0_105, %c3_106, %c0_107, %c0_108] : memref<1x1x4x1x128xf32, #tpu.memory_space<vmem>>, vector<1x1x1x1x128xf32>
    %128 = vector.shape_cast %127 : vector<1x1x1x1x128xf32> to vector<1x128xf32>
    %cst_109 = arith.constant dense<0.000000e+00> : vector<128xf32>
    %129 = vector.multi_reduction <add>, %118, %cst_109 [0] : vector<32x128xf32> to vector<128xf32>
    %130 = vector.shape_cast %129 : vector<128xf32> to vector<1x128xf32>
    %131 = arith.addf %128, %130 : vector<1x128xf32>
    %c0_110 = arith.constant 0 : index
    %c0_111 = arith.constant 0 : index
    %c3_112 = arith.constant 3 : index
    %c0_113 = arith.constant 0 : index
    %c0_114 = arith.constant 0 : index
    %132 = vector.load %arg6[%c0_110, %c0_111, %c3_112, %c0_113, %c0_114] : memref<1x1x4x1x128xf32, #tpu.memory_space<vmem>>, vector<1x1x1x1x128xf32>
    %133 = vector.shape_cast %132 : vector<1x1x1x1x128xf32> to vector<1x128xf32>
    %134 = vector.shape_cast %131 : vector<1x128xf32> to vector<1x1x1x1x128xf32>
    tpu.vector_store %arg6[%c0_110, %c0_111, %c3_112, %c0_113, %c0_114], %134 {strides = array<i32>} : memref<1x1x4x1x128xf32, #tpu.memory_space<vmem>>, vector<1x1x1x1x128xf32>,
    return
  }
  func.func @transform_0(%arg0: i32, %arg1: i32, %arg2: i32) -> (i32, i32, i32, i32) {
    %c1_i32 = arith.constant 1 : i32
    %0 = arith.muli %arg0, %c1_i32 : i32
    %1 = arith.addi %0, %arg2 : i32
    %c0_i32 = arith.constant 0 : i32
    %c0_i32_0 = arith.constant 0 : i32
    %c0_i32_1 = arith.constant 0 : i32
    return %arg1, %c0_i32, %1, %c0_i32_0 : i32, i32, i32, i32
  }
  func.func @transform_1(%arg0: i32, %arg1: i32, %arg2: i32) -> (i32, i32, i32, i32) {
    %c1_i32 = arith.constant 1 : i32
    %0 = arith.muli %arg0, %c1_i32 : i32
    %1 = arith.addi %0, %arg2 : i32
    %c0_i32 = arith.constant 0 : i32
    %c0_i32_0 = arith.constant 0 : i32
    %c0_i32_1 = arith.constant 0 : i32
    return %arg1, %c0_i32, %1, %c0_i32_0 : i32, i32, i32, i32
  }
  func.func @transform_2(%arg0: i32, %arg1: i32, %arg2: i32) -> (i32, i32, i32, i32, i32) {
    %c0_i32 = arith.constant 0 : i32
    %c0_i32_0 = arith.constant 0 : i32
    %c0_i32_1 = arith.constant 0 : i32
    %c0_i32_2 = arith.constant 0 : i32
    return %arg0, %arg1, %c0_i32, %c0_i32_0, %c0_i32_1 : i32, i32, i32, i32, i32
  }
  func.func @transform_3(%arg0: i32, %arg1: i32, %arg2: i32) -> (i32, i32, i32, i32, i32) {
    %c0_i32 = arith.constant 0 : i32
    %c0_i32_0 = arith.constant 0 : i32
    %c0_i32_1 = arith.constant 0 : i32
    %c0_i32_2 = arith.constant 0 : i32
    return %arg0, %arg1, %c0_i32, %c0_i32_0, %c0_i32_1 : i32, i32, i32, i32, i32
  }
}

</mosaic_0001>

<llo_original>
// kernel: tpu_custom_call.1
$region0: #{tpu_custom_call.1}
  #allocation0 [shape = 'u32[]', space=smem, size = 0x4, offset = 0x4, fixed_abs, tag = 'smem constant byte address 0x4 - core index']
  #allocation1 [shape = 'u32[144,128]{1,0:T(1,128)}', space=vmem, size = 0x12000, scoped, tag = 'internal scratch']
  %s0 = inlined_call_operand.hbm [shape: f32[2,4,32,128], index: 0, kind: input, shape index: {}]
  %s1 = inlined_call_operand.hbm [shape: s8[2,1,32,128], index: 1, kind: input, shape index: {}]
  %s2 = inlined_call_operand.hbm [shape: f32[1,2,4,1,128], index: 2, kind: output, shape index: {0}]
  %s3 = inlined_call_operand.hbm [shape: f32[1,2,4,1,128], index: 3, kind: output, shape index: {1}]
  %4 = xla_tuple %s2, %s3
  %s5 = sld [smem:[#allocation0]]
  $region61: #{tpu_custom_call.1} parent=0
    _
  %s7 = ssub.s32 1, %s5
  %s8 = scalar_select 0, %s7, %s5
  $region1: #{tpu_custom_call.1} parent=0
    #allocation2 [shape = 'u8[131072]{0}', space=vmem, size = 0x20000, scoped, tag = 'input window, operand 0']
    #allocation3 [shape = 's32[2]{0}', space=sflag, size = 0x8, scoped, tag = 'scoped memory for tpu_custom_call.1']
    #allocation4 [shape = 's32[2]{0}', space=sflag, size = 0x8, scoped, tag = 'scoped memory for tpu_custom_call.1']
    #allocation5 [shape = 'u8[8192]{0}', space=vmem, size = 0x2000, scoped, tag = 'input window, operand 1']
    #allocation6 [shape = 's32[2]{0}', space=sflag, size = 0x8, scoped, tag = 'scoped memory for tpu_custom_call.1']
    #allocation7 [shape = 'u8[4096]{0}', space=vmem, size = 0x1000, scoped, tag = 'output window, operand 0']
    #allocation8 [shape = 'u8[4096]{0}', space=vmem, size = 0x1000, scoped, tag = 'output window, operand 1']
    #allocation9 [shape = 's32[2]{0}', space=sflag, size = 0x8, scoped, tag = 'scoped memory for tpu_custom_call.1']
    %9 = vsyncpa [#allocation3], 0
    %s10 = scalar_lea.sflag [#allocation3], 1
    %11 = vsyncpa %s10, 0
    %12 = vsyncpa [#allocation6], 0
    %s13 = scalar_lea.sflag [#allocation6], 1
    %14 = vsyncpa %s13, 0
    %15 = vsyncpa [#allocation4], 0
    %s16 = scalar_lea.sflag [#allocation4], 1
    %17 = vsyncpa %s16, 0
    %18 = vsyncpa [#allocation9], 0
    %s19 = scalar_lea.sflag [#allocation9], 1
    %20 = vsyncpa %s19, 0
    loop: start=0, step=1, limit=4
    $region2: #{tpu_custom_call.1} parent=1 // loop_pre_header
      _
    $region3: #{tpu_custom_call.1} parent=1 // loop_header
      %s22 = sphi 0, %s26
      %p23 = scmp.ge.s32.totalorder %s22, 4
      %s29 = sphi 0, %s48
      %s30 = sphi 0, %s44
      %s31 = sphi 0, %s40
      %s32 = sphi 0, %s29
      %s33 = sphi 0, %s30
      %s34 = sphi 0, %s31
      %s35 = sphi 0, %s32
      %s36 = sphi 0, %s33
      %s37 = sphi 0, %s34
      %s55 = sphi 0, %s57
      %s58 = sphi 0, %s55
      %s59 = sphi 0, %s58
      %s75 = sphi 0, %s59
      %s85 = sphi 0, %s87
      %s88 = sphi 0, %s85
      %s89 = sphi 0, %s88
      %s105 = sphi 0, %s89
      %s113 = sphi 0, %s115
      %s116 = sphi 0, %s113
      %s117 = sphi 0, %s116
      %s133 = sphi 0, %s117
      %s141 = sphi 0, %s143
      %s144 = sphi 0, %s141
      %s145 = sphi 0, %s144
      %s161 = sphi 0, %s145
    $region4: #{tpu_custom_call.1} parent=1 // loop_header_branch
      %25 = sbr.rel (%p23) target = $region8
    $region5: #{tpu_custom_call.1} parent=1 // loop_body
      %s27 = ssub.s32 %s22, 1
      %s28 = ssub.s32 %s22, 2
      %s38 = sadd.s32 1, %s31
      %p39 = scmp.ge.s32.totalorder %s38, 1
      %s40 = scalar_select %p39, 0, %s38
      %s41 = sadd.s32 1, %s30
      %s42 = scalar_select %p39, %s41, %s30
      %p43 = scmp.ge.s32.totalorder %s42, 2
      %s44 = scalar_select %p43, 0, %s42
      %s45 = sadd.s32 1, %s29
      %s46 = scalar_select %p43, %s45, %s29
      %p47 = scmp.ge.s32.totalorder %s46, 1
      %s48 = scalar_select %p47, 0, %s46
      %s49 = sadd.s32 %s29, %s31
      %s50 = sadd.s32 %s48, %s40
      %s51 = ssub.s32 %s30, %s44
      %s52 = ssub.s32 %s49, %s50
      %s53 = sor.u32 %s51, %s52
      %p54 = scmp.eq.s32.totalorder %s53, 0
      %s56 = sadd.s32 %s55, 1
      %s57 = scalar_select %p54, %s55, %s56
      %p60 = pneg %p54
      %p61 = scmp.eq.s32.totalorder %s22, 1
      %p62 = por %p60, %p61
      %p63 = scmp.ne.s32.totalorder %s55, %s58
      %p64 = scmp.eq.s32.totalorder %s22, 0
      %p65 = por %p63, %p64
      %p66 = scmp.ne.s32.totalorder %s55, %s58
      %p67 = scmp.eq.s32.totalorder %s27, 1
      %p68 = por %p66, %p67
      %p69 = scmp.ne.s32.totalorder %s58, %s59
      %p70 = scmp.eq.s32.totalorder %s27, 0
      %p71 = por %p69, %p70
      %p72 = scmp.ne.s32.totalorder %s58, %s59
      %p73 = scmp.eq.s32.totalorder %s28, 1
      %p74 = por %p72, %p73
      %p76 = scmp.ne.s32.totalorder %s59, %s75
      %p77 = scmp.eq.s32.totalorder %s28, 0
      %p78 = por %p76, %p77
      %s79 = sadd.s32 %s29, %s31
      %s80 = sadd.s32 %s48, %s40
      %s81 = ssub.s32 %s30, %s44
      %s82 = ssub.s32 %s79, %s80
      %s83 = sor.u32 %s81, %s82
      %p84 = scmp.eq.s32.totalorder %s83, 0
      %s86 = sadd.s32 %s85, 1
      %s87 = scalar_select %p84, %s85, %s86
      %p90 = pneg %p84
      %p91 = scmp.eq.s32.totalorder %s22, 1
      %p92 = por %p90, %p91
      %p93 = scmp.ne.s32.totalorder %s85, %s88
      %p94 = scmp.eq.s32.totalorder %s22, 0
      %p95 = por %p93, %p94
      %p96 = scmp.ne.s32.totalorder %s85, %s88
      %p97 = scmp.eq.s32.totalorder %s27, 1
      %p98 = por %p96, %p97
      %p99 = scmp.ne.s32.totalorder %s88, %s89
      %p100 = scmp.eq.s32.totalorder %s27, 0
      %p101 = por %p99, %p100
      %p102 = scmp.ne.s32.totalorder %s88, %s89
      %p103 = scmp.eq.s32.totalorder %s28, 1
      %p104 = por %p102, %p103
      %p106 = scmp.ne.s32.totalorder %s89, %s105
      %p107 = scmp.eq.s32.totalorder %s28, 0
      %p108 = por %p106, %p107
      %s109 = ssub.s32 %s29, %s48
      %s110 = ssub.s32 %s30, %s44
      %s111 = sor.u32 %s109, %s110
      %p112 = scmp.eq.s32.totalorder %s111, 0
      %s114 = sadd.s32 %s113, 1
      %s115 = scalar_select %p112, %s113, %s114
      %p118 = pneg %p112
      %p119 = scmp.eq.s32.totalorder %s22, 1
      %p120 = por %p118, %p119
      %p121 = scmp.ne.s32.totalorder %s113, %s116
      %p122 = scmp.eq.s32.totalorder %s22, 0
      %p123 = por %p121, %p122
      %p124 = scmp.ne.s32.totalorder %s113, %s116
      %p125 = scmp.eq.s32.totalorder %s27, 1
      %p126 = por %p124, %p125
      %p127 = scmp.ne.s32.totalorder %s116, %s117
      %p128 = scmp.eq.s32.totalorder %s27, 0
      %p129 = por %p127, %p128
      %p130 = scmp.ne.s32.totalorder %s116, %s117
      %p131 = scmp.eq.s32.totalorder %s28, 1
      %p132 = por %p130, %p131
      %p134 = scmp.ne.s32.totalorder %s117, %s133
      %p135 = scmp.eq.s32.totalorder %s28, 0
      %p136 = por %p134, %p135
      %s137 = ssub.s32 %s29, %s48
      %s138 = ssub.s32 %s30, %s44
      %s139 = sor.u32 %s137, %s138
      %p140 = scmp.eq.s32.totalorder %s139, 0
      %s142 = sadd.s32 %s141, 1
      %s143 = scalar_select %p140, %s141, %s142
      %p146 = pneg %p140
      %p147 = scmp.eq.s32.totalorder %s22, 1
      %p148 = por %p146, %p147
      %p149 = scmp.ne.s32.totalorder %s141, %s144
      %p150 = scmp.eq.s32.totalorder %s22, 0
      %p151 = por %p149, %p150
      %p152 = scmp.ne.s32.totalorder %s141, %s144
      %p153 = scmp.eq.s32.totalorder %s27, 1
      %p154 = por %p152, %p153
      %p155 = scmp.ne.s32.totalorder %s144, %s145
      %p156 = scmp.eq.s32.totalorder %s27, 0
      %p157 = por %p155, %p156
      %p158 = scmp.ne.s32.totalorder %s144, %s145
      %p159 = scmp.eq.s32.totalorder %s28, 1
      %p160 = por %p158, %p159
      %p162 = scmp.ne.s32.totalorder %s145, %s161
      %p163 = scmp.eq.s32.totalorder %s28, 0
      %p164 = por %p162, %p163
      %p165 = scmp.le.s32.totalorder 1, %s22
      %p166 = scmp.lt.s32.totalorder %s22, 3
      %p167 = pnand %p165, %p166
      %p168 = pneg %p167
      // Predicated region
      $region9: #{tpu_custom_call.1} parent=5 // pred_check
        _
      $region10: #{tpu_custom_call.1} parent=5 // pred_check_branch
        %170 = sbr.rel (%p167) target = $region12
      $region11: #{tpu_custom_call.1} parent=5 // pred_region
        %s171 = ssub.s32 %s22, 1
      $region12: #{tpu_custom_call.1} parent=5 // pred_fallthru
        _
      %p172 = scmp.lt.s32.totalorder %s22, 2
      // Predicated region
      $region13: #{tpu_custom_call.1} parent=5 // pred_check
        %p173 = pneg %p172
      $region14: #{tpu_custom_call.1} parent=5 // pred_check_branch
        %175 = sbr.rel (%p173) target = $region16
      $region15: #{tpu_custom_call.1} parent=5 // pred_region
        // Predicated region
        $region17: #{tpu_custom_call.1} parent=15 // pred_check
          %p176 = pneg %p65
        $region18: #{tpu_custom_call.1} parent=15 // pred_check_branch
          %178 = sbr.rel (%p176) target = $region20
        $region19: #{tpu_custom_call.1} parent=15 // pred_region
          %s179 = sand.u32 %s55, 1
          %s180 = scalar_lea.sflag [#allocation3], %s179
          %s181 = sand.u32 %s55, 1
          %s182 = smul.addr %s181, 128
          %s183 = scalar_lea.vmem [#allocation2], %s182
          %s184 = sadd.s32 %s29, %s31
          %s185 = smul.u32 4, %s184
          %s187 = ssub.s32 2048, 2048
          %188 = vsyncadd %s180, %s187
          %s189 = smul.addr %s30, 16
          %s190 = sadd.s32 %s185, %s189
          %s191 = smul.addr %s190, 128
          %s192 = scalar_lea.hbm %s0, %s191
          %s193 = sshll.u32 %s183, 4
          %s194 = int_to_ptr.vmem [resolvable:$true] %s193
          %199 = dma.hbm_to_vmem [thread:$0]  %s192, 2048, %s194, %s180, 128, 128, 8
        $region20: #{tpu_custom_call.1} parent=15 // pred_fallthru
          _
        // Predicated region
        $region21: #{tpu_custom_call.1} parent=15 // pred_check
          %p200 = pneg %p95
        $region22: #{tpu_custom_call.1} parent=15 // pred_check_branch
          %202 = sbr.rel (%p200) target = $region24
        $region23: #{tpu_custom_call.1} parent=15 // pred_region
          %s203 = sand.u32 %s85, 1
          %s204 = scalar_lea.sflag [#allocation6], %s203
          %s205 = sand.u32 %s85, 1
          %s206 = smul.addr %s205, 8
          %s207 = scalar_lea.vmem [#allocation5], %s206
          %s208 = sadd.s32 %s29, %s31
          %s210 = ssub.s32 128, 128
          %211 = vsyncadd %s204, %s210
          %s212 = sadd.s32 %s208, %s30
          %s213 = smul.addr %s212, 128
          %s214 = scalar_lea.hbm %s1, %s213
          %s216 = sshll.u32 %s207, 4
          %s217 = int_to_ptr.vmem [resolvable:$true] %s216
          %219 = dma.hbm_to_vmem [thread:$0]  %s214, 128, %s217, %s204
        $region24: #{tpu_custom_call.1} parent=15 // pred_fallthru
          _
      $region16: #{tpu_custom_call.1} parent=5 // pred_fallthru
        _
      %p220 = scmp.le.s32.totalorder 1, %s22
      %p221 = scmp.lt.s32.totalorder %s22, 3
      %p222 = pnand %p220, %p221
      %p223 = pneg %p222
      // Predicated region
      $region25: #{tpu_custom_call.1} parent=5 // pred_check
        _
      $region26: #{tpu_custom_call.1} parent=5 // pred_check_branch
        %225 = sbr.rel (%p222) target = $region28
      $region27: #{tpu_custom_call.1} parent=5 // pred_region
        %s226 = ssub.s32 %s22, 1
        %s227 = sand.u32 %s58, 1
        %s228 = scalar_lea.sflag [#allocation3], %s227
        %s229 = sand.u32 %s58, 1
        %s230 = smul.addr %s229, 128
        %s231 = scalar_lea.vmem [#allocation2], %s230
        // Predicated region
        $region29: #{tpu_custom_call.1} parent=27 // pred_check
          %p232 = pneg %p71
        $region30: #{tpu_custom_call.1} parent=27 // pred_check_branch
          %234 = sbr.rel (%p232) target = $region32
        $region31: #{tpu_custom_call.1} parent=27 // pred_region
          %235 = dma.done %s228, 2048
        $region32: #{tpu_custom_call.1} parent=27 // pred_fallthru
          _
        %s236 = sand.u32 %s88, 1
        %s237 = scalar_lea.sflag [#allocation6], %s236
        %s238 = sand.u32 %s88, 1
        %s239 = smul.addr %s238, 8
        %s240 = scalar_lea.vmem [#allocation5], %s239
        // Predicated region
        $region33: #{tpu_custom_call.1} parent=27 // pred_check
          %p241 = pneg %p101
        $region34: #{tpu_custom_call.1} parent=27 // pred_check_branch
          %243 = sbr.rel (%p241) target = $region36
        $region35: #{tpu_custom_call.1} parent=27 // pred_region
          %244 = dma.done %s237, 128
        $region36: #{tpu_custom_call.1} parent=27 // pred_fallthru
          _
        %s245 = sand.u32 %s58, 1
        %s246 = scalar_lea.sflag [#allocation3], %s245
        %s247 = sand.u32 %s58, 1
        %s248 = smul.addr %s247, 128
        %s249 = scalar_lea.vmem [#allocation2], %s248
        %p250 = pneg %p71
        %p251 = pneg %p68
        %s252 = sand.u32 %s88, 1
        %s253 = scalar_lea.sflag [#allocation6], %s252
        %s254 = sand.u32 %s88, 1
        %s255 = smul.addr %s254, 8
        %s256 = scalar_lea.vmem [#allocation5], %s255
        %p257 = pneg %p101
        %p258 = pneg %p98
        %p259 = pneg %p129
        %p260 = pneg %p126
        %s261 = sand.u32 %s116, 1
        %s262 = scalar_lea.sflag [#allocation4], %s261
        %s263 = sand.u32 %s116, 1
        %s264 = smul.addr %s263, 4
        %s265 = scalar_lea.vmem [#allocation7], %s264
        %p266 = pneg %p157
        %p267 = pneg %p154
        %s268 = sand.u32 %s144, 1
        %s269 = scalar_lea.sflag [#allocation9], %s268
        %s270 = sand.u32 %s144, 1
        %s271 = smul.addr %s270, 4
        %s272 = scalar_lea.vmem [#allocation8], %s271
        %s273 = sadd.s32 %s32, %s34
        %s274 = smul.u32 4, %s273
        %s275 = sadd.s32 %s32, %s34
        %p276 = scmp.eq.s32.totalorder %s34, 0
        // Predicated region
        $region37: #{tpu_custom_call.1} parent=27 // pred_check
          %p277 = pneg %p276
        $region38: #{tpu_custom_call.1} parent=27 // pred_check_branch
          %279 = sbr.rel (%p277) target = $region40
        $region39: #{tpu_custom_call.1} parent=27 // pred_region
          %280 = vst [vmem:[%s265] sm:$0x1] 0.0
          %281 = vst [vmem:[%s265 + $0x1] sm:$0x1] 0.0
          %282 = vst [vmem:[%s265 + $0x2] sm:$0x1] 0.0
          %283 = vst [vmem:[%s265 + $0x3] sm:$0x1] 0.0
          %284 = vst [vmem:[%s272] sm:$0x1] 0.0
          %285 = vst [vmem:[%s272 + $0x1] sm:$0x1] 0.0
          %286 = vst [vmem:[%s272 + $0x2] sm:$0x1] 0.0
          %287 = vst [vmem:[%s272 + $0x3] sm:$0x1] 0.0
        $region40: #{tpu_custom_call.1} parent=27 // pred_fallthru
          _
        %v288 = vld [vmem:[%s240] sm:$0xff]
        %v289 = vunpack.c.0.s8 %v288
        %v290 = vunpack.c.1.s8 %v288
        %v291 = vunpack.c.2.s8 %v288
        %v292 = vunpack.c.3.s8 %v288
        %v293 = vld [vmem:[%s231] sm:$0xff]
        %v294 = vld [vmem:[%s231 + $0x8] sm:$0xff]
        %v295 = vld [vmem:[%s231 + $0x10] sm:$0xff]
        %v296 = vld [vmem:[%s231 + $0x18] sm:$0xff]
        %s297 = scalar_lea.vmem %s231, 32 [#allocation2]
        %v298 = vld [vmem:[%s297] sm:$0xff]
        %v299 = vld [vmem:[%s297 + $0x8] sm:$0xff]
        %v300 = vld [vmem:[%s297 + $0x10] sm:$0xff]
        %v301 = vld [vmem:[%s297 + $0x18] sm:$0xff]
        %s302 = scalar_lea.vmem %s231, 64 [#allocation2]
        %v303 = vld [vmem:[%s302] sm:$0xff]
        %v304 = vld [vmem:[%s302 + $0x8] sm:$0xff]
        %v305 = vld [vmem:[%s302 + $0x10] sm:$0xff]
        %v306 = vld [vmem:[%s302 + $0x18] sm:$0xff]
        %s307 = scalar_lea.vmem %s231, 96 [#allocation2]
        %v308 = vld [vmem:[%s307] sm:$0xff]
        %v309 = vld [vmem:[%s307 + $0x8] sm:$0xff]
        %v310 = vld [vmem:[%s307 + $0x10] sm:$0xff]
        %v311 = vld [vmem:[%s307 + $0x18] sm:$0xff]
        %v312 = vmax.f32 %v293, %v298
        %v313 = vmax.f32 %v294, %v299
        %v314 = vmax.f32 %v295, %v300
        %v315 = vmax.f32 %v296, %v301
        %v316 = vmax.f32 %v312, %v303
        %v317 = vmax.f32 %v313, %v304
        %v318 = vmax.f32 %v314, %v305
        %v319 = vmax.f32 %v315, %v306
        %v320 = vmax.f32 %v316, %v308
        %v321 = vmax.f32 %v317, %v309
        %v322 = vmax.f32 %v318, %v310
        %v323 = vmax.f32 %v319, %v311
        %v324 = vsub.f32 %v293, %v320
        %v325 = vsub.f32 %v294, %v321
        %v326 = vsub.f32 %v295, %v322
        %v327 = vsub.f32 %v296, %v323
        %v328 = vmul.f32 %v324, 1.442695
        %v329 = vpow.pop %v328
        %v330 = vmul.f32 %v325, 1.442695
        %v331 = vpow.pop %v330
        %v332 = vmul.f32 %v326, 1.442695
        %v333 = vpow.pop %v332
        %v334 = vmul.f32 %v327, 1.442695
        %v335 = vpow.pop %v334
        %v336 = vsub.f32 %v298, %v320
        %v337 = vsub.f32 %v299, %v321
        %v338 = vsub.f32 %v300, %v322
        %v339 = vsub.f32 %v301, %v323
        %v340 = vmul.f32 %v336, 1.442695
        %v341 = vpow.pop %v340
        %v342 = vmul.f32 %v337, 1.442695
        %v343 = vpow.pop %v342
        %v344 = vmul.f32 %v338, 1.442695
        %v345 = vpow.pop %v344
        %v346 = vmul.f32 %v339, 1.442695
        %v347 = vpow.pop %v346
        %v348 = vadd.f32 %v329, %v341
        %v349 = vadd.f32 %v331, %v343
        %v350 = vadd.f32 %v333, %v345
        %v351 = vadd.f32 %v335, %v347
        %v352 = vsub.f32 %v303, %v320
        %v353 = vsub.f32 %v304, %v321
        %v354 = vsub.f32 %v305, %v322
        %v355 = vsub.f32 %v306, %v323
        %v356 = vmul.f32 %v352, 1.442695
        %v357 = vpow.pop %v356
        %v358 = vmul.f32 %v353, 1.442695
        %v359 = vpow.pop %v358
        %v360 = vmul.f32 %v354, 1.442695
        %v361 = vpow.pop %v360
        %v362 = vmul.f32 %v355, 1.442695
        %v363 = vpow.pop %v362
        %v364 = vadd.f32 %v348, %v357
        %v365 = vadd.f32 %v349, %v359
        %v366 = vadd.f32 %v350, %v361
        %v367 = vadd.f32 %v351, %v363
        %v368 = vsub.f32 %v308, %v320
        %v369 = vsub.f32 %v309, %v321
        %v370 = vsub.f32 %v310, %v322
        %v371 = vsub.f32 %v311, %v323
        %v372 = vmul.f32 %v368, 1.442695
        %v373 = vpow.pop %v372
        %v374 = vmul.f32 %v369, 1.442695
        %v375 = vpow.pop %v374
        %v376 = vmul.f32 %v370, 1.442695
        %v377 = vpow.pop %v376
        %v378 = vmul.f32 %v371, 1.442695
        %v379 = vpow.pop %v378
        %v380 = vadd.f32 %v364, %v373
        %v381 = vadd.f32 %v365, %v375
        %v382 = vadd.f32 %v366, %v377
        %v383 = vadd.f32 %v367, %v379
        %v384 = vrcp.pop %v380
        %v385 = vrcp.pop %v381
        %v386 = vrcp.pop %v382
        %v387 = vrcp.pop %v383
        %s388 = sadd.s32 %s32, %s34
        %v389 = vlaneseq
        %v390 = vshrl.u32 %v389, 7
        %v391 = vadd.s32 %v390, 8
        %v392 = vadd.s32 %v390, 16
        %v393 = vadd.s32 %v390, 24
        %v394 = vlaneseq
        %v395 = vand.u32 %v394, 127
        %s396 = smul.u32 %s388, 32
        %v397 = vstv %s396
        %v398 = vadd.s32 %v397, %v390
        %v399 = vadd.s32 %v397, %v391
        %v400 = vadd.s32 %v397, %v392
        %v401 = vadd.s32 %v397, %v393
        %v402 = vmul.u32 %v398, 128
        %v403 = vmul.u32 %v399, 128
        %v404 = vmul.u32 %v400, 128
        %v405 = vmul.u32 %v401, 128
        %v406 = vadd.s32 %v402, %v395
        %v407 = vadd.s32 %v403, %v395
        %v408 = vadd.s32 %v404, %v395
        %v409 = vadd.s32 %v405, %v395
        %vm410 = vcmp.lt.s32.totalorder %v406, 256
        %vm411 = vcmp.lt.s32.totalorder %v407, 256
        %vm412 = vcmp.lt.s32.totalorder %v408, 256
        %vm413 = vcmp.lt.s32.totalorder %v409, 256
        %v414 = vsel %vm410, %v384, 0.0
        %v415 = vsel %vm411, %v385, 0.0
        %v416 = vsel %vm412, %v386, 0.0
        %v417 = vsel %vm413, %v387, 0.0
        %v418 = vmul.f32 %v329, %v414
        %v419 = vmul.f32 %v331, %v415
        %v420 = vmul.f32 %v333, %v416
        %v421 = vmul.f32 %v335, %v417
        %vm422 = vcmp.eq.s32.totalorder %v289, 0
        %vm423 = vcmp.eq.s32.totalorder %v290, 0
        %vm424 = vcmp.eq.s32.totalorder %v291, 0
        %vm425 = vcmp.eq.s32.totalorder %v292, 0
        %v426 = vsel %vm422, %v418, 0.0
        %v427 = vsel %vm423, %v419, 0.0
        %v428 = vsel %vm424, %v420, 0.0
        %v429 = vsel %vm425, %v421, 0.0
        %v430 = vsel %vm422, 1.0, %v418
        %v431 = vsel %vm423, 1.0, %v419
        %v432 = vsel %vm424, 1.0, %v420
        %v433 = vsel %vm425, 1.0, %v421
        %v434 = vld [vmem:[%s265] sm:$0x1]
        %v435 = vadd.f32 %v426, %v427
        %v436 = vadd.f32 %v435, %v428
        %v437 = vadd.f32 %v436, %v429
        %v438 = vrot.slane %v437, 4
        %v439 = vadd.f32 %v437, %v438
        %v440 = vrot.slane %v439, 2
        %v441 = vadd.f32 %v439, %v440
        %v442 = vrot.slane %v441, 1
        %v443 = vadd.f32 %v441, %v442
        %v444 = vadd.f32 %v434, %v443
        %445 = vst [vmem:[%s265] sm:$0x1] %v444
        %v446 = vld [vmem:[%s272] sm:$0x1]
        %v447 = vadd.f32 %v430, %v431
        %v448 = vadd.f32 %v447, %v432
        %v449 = vadd.f32 %v448, %v433
        %v450 = vrot.slane %v449, 4
        %v451 = vadd.f32 %v449, %v450
        %v452 = vrot.slane %v451, 2
        %v453 = vadd.f32 %v451, %v452
        %v454 = vrot.slane %v453, 1
        %v455 = vadd.f32 %v453, %v454
        %v456 = vadd.f32 %v446, %v455
        %457 = vst [vmem:[%s272] sm:$0x1] %v456
        %v458 = vmul.f32 %v341, %v414
        %v459 = vmul.f32 %v343, %v415
        %v460 = vmul.f32 %v345, %v416
        %v461 = vmul.f32 %v347, %v417
        %vm462 = vcmp.eq.s32.totalorder %v289, 1
        %vm463 = vcmp.eq.s32.totalorder %v290, 1
        %vm464 = vcmp.eq.s32.totalorder %v291, 1
        %vm465 = vcmp.eq.s32.totalorder %v292, 1
        %v466 = vsel %vm462, %v458, 0.0
        %v467 = vsel %vm463, %v459, 0.0
        %v468 = vsel %vm464, %v460, 0.0
        %v469 = vsel %vm465, %v461, 0.0
        %v470 = vsel %vm462, 1.0, %v458
        %v471 = vsel %vm463, 1.0, %v459
        %v472 = vsel %vm464, 1.0, %v460
        %v473 = vsel %vm465, 1.0, %v461
        %s474 = scalar_lea.vmem %s265, 1 [#allocation7]
        %v475 = vld [vmem:[%s474] sm:$0x1]
        %v476 = vadd.f32 %v466, %v467
        %v477 = vadd.f32 %v476, %v468
        %v478 = vadd.f32 %v477, %v469
        %v479 = vrot.slane %v478, 4
        %v480 = vadd.f32 %v478, %v479
        %v481 = vrot.slane %v480, 2
        %v482 = vadd.f32 %v480, %v481
        %v483 = vrot.slane %v482, 1
        %v484 = vadd.f32 %v482, %v483
        %v485 = vadd.f32 %v475, %v484
        %486 = vst [vmem:[%s474] sm:$0x1] %v485
        %s487 = scalar_lea.vmem %s272, 1 [#allocation8]
        %v488 = vld [vmem:[%s487] sm:$0x1]
        %v489 = vadd.f32 %v470, %v471
        %v490 = vadd.f32 %v489, %v472
        %v491 = vadd.f32 %v490, %v473
        %v492 = vrot.slane %v491, 4
        %v493 = vadd.f32 %v491, %v492
        %v494 = vrot.slane %v493, 2
        %v495 = vadd.f32 %v493, %v494
        %v496 = vrot.slane %v495, 1
        %v497 = vadd.f32 %v495, %v496
        %v498 = vadd.f32 %v488, %v497
        %499 = vst [vmem:[%s487] sm:$0x1] %v498
        %v500 = vmul.f32 %v357, %v414
        %v501 = vmul.f32 %v359, %v415
        %v502 = vmul.f32 %v361, %v416
        %v503 = vmul.f32 %v363, %v417
        %vm504 = vcmp.eq.s32.totalorder %v289, 2
        %vm505 = vcmp.eq.s32.totalorder %v290, 2
        %vm506 = vcmp.eq.s32.totalorder %v291, 2
        %vm507 = vcmp.eq.s32.totalorder %v292, 2
        %v508 = vsel %vm504, %v500, 0.0
        %v509 = vsel %vm505, %v501, 0.0
        %v510 = vsel %vm506, %v502, 0.0
        %v511 = vsel %vm507, %v503, 0.0
        %v512 = vsel %vm504, 1.0, %v500
        %v513 = vsel %vm505, 1.0, %v501
        %v514 = vsel %vm506, 1.0, %v502
        %v515 = vsel %vm507, 1.0, %v503
        %s516 = scalar_lea.vmem %s265, 2 [#allocation7]
        %v517 = vld [vmem:[%s516] sm:$0x1]
        %v518 = vadd.f32 %v508, %v509
        %v519 = vadd.f32 %v518, %v510
        %v520 = vadd.f32 %v519, %v511
        %v521 = vrot.slane %v520, 4
        %v522 = vadd.f32 %v520, %v521
        %v523 = vrot.slane %v522, 2
        %v524 = vadd.f32 %v522, %v523
        %v525 = vrot.slane %v524, 1
        %v526 = vadd.f32 %v524, %v525
        %v527 = vadd.f32 %v517, %v526
        %528 = vst [vmem:[%s516] sm:$0x1] %v527
        %s529 = scalar_lea.vmem %s272, 2 [#allocation8]
        %v530 = vld [vmem:[%s529] sm:$0x1]
        %v531 = vadd.f32 %v512, %v513
        %v532 = vadd.f32 %v531, %v514
        %v533 = vadd.f32 %v532, %v515
        %v534 = vrot.slane %v533, 4
        %v535 = vadd.f32 %v533, %v534
        %v536 = vrot.slane %v535, 2
        %v537 = vadd.f32 %v535, %v536
        %v538 = vrot.slane %v537, 1
        %v539 = vadd.f32 %v537, %v538
        %v540 = vadd.f32 %v530, %v539
        %541 = vst [vmem:[%s529] sm:$0x1] %v540
        %v542 = vmul.f32 %v373, %v414
        %v543 = vmul.f32 %v375, %v415
        %v544 = vmul.f32 %v377, %v416
        %v545 = vmul.f32 %v379, %v417
        %vm546 = vcmp.eq.s32.totalorder %v289, 3
        %vm547 = vcmp.eq.s32.totalorder %v290, 3
        %vm548 = vcmp.eq.s32.totalorder %v291, 3
        %vm549 = vcmp.eq.s32.totalorder %v292, 3
        %v550 = vsel %vm546, %v542, 0.0
        %v551 = vsel %vm547, %v543, 0.0
        %v552 = vsel %vm548, %v544, 0.0
        %v553 = vsel %vm549, %v545, 0.0
        %v554 = vsel %vm546, 1.0, %v542
        %v555 = vsel %vm547, 1.0, %v543
        %v556 = vsel %vm548, 1.0, %v544
        %v557 = vsel %vm549, 1.0, %v545
        %s558 = scalar_lea.vmem %s265, 3 [#allocation7]
        %v559 = vld [vmem:[%s558] sm:$0x1]
        %v560 = vadd.f32 %v550, %v551
        %v561 = vadd.f32 %v560, %v552
        %v562 = vadd.f32 %v561, %v553
        %v563 = vrot.slane %v562, 4
        %v564 = vadd.f32 %v562, %v563
        %v565 = vrot.slane %v564, 2
        %v566 = vadd.f32 %v564, %v565
        %v567 = vrot.slane %v566, 1
        %v568 = vadd.f32 %v566, %v567
        %v569 = vadd.f32 %v559, %v568
        %570 = vst [vmem:[%s558] sm:$0x1] %v569
        %s571 = scalar_lea.vmem %s272, 3 [#allocation8]
        %v572 = vld [vmem:[%s571] sm:$0x1]
        %v573 = vadd.f32 %v554, %v555
        %v574 = vadd.f32 %v573, %v556
        %v575 = vadd.f32 %v574, %v557
        %v576 = vrot.slane %v575, 4
        %v577 = vadd.f32 %v575, %v576
        %v578 = vrot.slane %v577, 2
        %v579 = vadd.f32 %v577, %v578
        %v580 = vrot.slane %v579, 1
        %v581 = vadd.f32 %v579, %v580
        %v582 = vadd.f32 %v572, %v581
        %583 = vst [vmem:[%s571] sm:$0x1] %v582
        %s584 = sand.u32 %s116, 1
        %s585 = scalar_lea.sflag [#allocation4], %s584
        %s586 = sand.u32 %s116, 1
        %s587 = smul.addr %s586, 4
        %s588 = scalar_lea.vmem [#allocation7], %s587
        %s589 = sand.u32 %s144, 1
        %s590 = scalar_lea.sflag [#allocation9], %s589
        %s591 = sand.u32 %s144, 1
        %s592 = smul.addr %s591, 4
        %s593 = scalar_lea.vmem [#allocation8], %s592
        // Predicated region
        $region41: #{tpu_custom_call.1} parent=27 // pred_check
          %p594 = pneg %p126
        $region42: #{tpu_custom_call.1} parent=27 // pred_check_branch
          %596 = sbr.rel (%p594) target = $region44
        $region43: #{tpu_custom_call.1} parent=27 // pred_region
          %s598 = ssub.s32 64, 64
          %599 = vsyncadd %s585, %s598
          %s600 = smul.addr %s33, 4
          %s601 = smul.addr %s32, 8
          %s602 = sadd.s32 %s600, %s601
          %s603 = smul.addr %s602, 16
          %s604 = scalar_lea.hbm %s2, %s603
          %s605 = sshll.u32 %s588, 4
          %s606 = int_to_ptr.vmem [resolvable:$true] %s605
          %611 = dma.vmem_to_hbm [thread:$0]  %s606, 64, %s604, %s585, 16, 16, 1
        $region44: #{tpu_custom_call.1} parent=27 // pred_fallthru
          _
        // Predicated region
        $region45: #{tpu_custom_call.1} parent=27 // pred_check
          %p612 = pneg %p154
        $region46: #{tpu_custom_call.1} parent=27 // pred_check_branch
          %614 = sbr.rel (%p612) target = $region48
        $region47: #{tpu_custom_call.1} parent=27 // pred_region
          %s616 = ssub.s32 64, 64
          %617 = vsyncadd %s590, %s616
          %s618 = smul.addr %s33, 4
          %s619 = smul.addr %s32, 8
          %s620 = sadd.s32 %s618, %s619
          %s621 = smul.addr %s620, 16
          %s622 = scalar_lea.hbm %s3, %s621
          %s623 = sshll.u32 %s593, 4
          %s624 = int_to_ptr.vmem [resolvable:$true] %s623
          %629 = dma.vmem_to_hbm [thread:$0]  %s624, 64, %s622, %s590, 16, 16, 1
        $region48: #{tpu_custom_call.1} parent=27 // pred_fallthru
          _
      $region28: #{tpu_custom_call.1} parent=5 // pred_fallthru
        _
      %p630 = scmp.le.s32.totalorder 2, %s22
      // Predicated region
      $region49: #{tpu_custom_call.1} parent=5 // pred_check
        %p631 = pneg %p630
      $region50: #{tpu_custom_call.1} parent=5 // pred_check_branch
        %633 = sbr.rel (%p631) target = $region52
      $region51: #{tpu_custom_call.1} parent=5 // pred_region
        %s634 = ssub.s32 %s22, 2
        // Predicated region
        $region53: #{tpu_custom_call.1} parent=51 // pred_check
          %p635 = pneg %p132
        $region54: #{tpu_custom_call.1} parent=51 // pred_check_branch
          %637 = sbr.rel (%p635) target = $region56
        $region55: #{tpu_custom_call.1} parent=51 // pred_region
          %s638 = sand.u32 %s117, 1
          %s639 = scalar_lea.sflag [#allocation4], %s638
          %s640 = sand.u32 %s117, 1
          %s641 = smul.addr %s640, 4
          %s642 = scalar_lea.vmem [#allocation7], %s641
          %643 = dma.done %s639, 64
        $region56: #{tpu_custom_call.1} parent=51 // pred_fallthru
          _
        // Predicated region
        $region57: #{tpu_custom_call.1} parent=51 // pred_check
          %p644 = pneg %p160
        $region58: #{tpu_custom_call.1} parent=51 // pred_check_branch
          %646 = sbr.rel (%p644) target = $region60
        $region59: #{tpu_custom_call.1} parent=51 // pred_region
          %s647 = sand.u32 %s145, 1
          %s648 = scalar_lea.sflag [#allocation9], %s647
          %s649 = sand.u32 %s145, 1
          %s650 = smul.addr %s649, 4
          %s651 = scalar_lea.vmem [#allocation8], %s650
          %652 = dma.done %s648, 64
        $region60: #{tpu_custom_call.1} parent=51 // pred_fallthru
          _
      $region52: #{tpu_custom_call.1} parent=5 // pred_fallthru
        _
    $region6: #{tpu_custom_call.1} parent=1 // loop_footer
      %s26 = sadd.s32 1, %s22
    $region7: #{tpu_custom_call.1} parent=1 // loop_footer_branch
      %21 = sbr.rel target = $region3
    $region8: #{tpu_custom_call.1} parent=1 // loop_exit
      _
    %653 = vsyncpa [#allocation3], 1
    %s654 = scalar_lea.sflag [#allocation3], 1
    %655 = vsyncpa %s654, 1
    %656 = vsyncpa [#allocation6], 1
    %s657 = scalar_lea.sflag [#allocation6], 1
    %658 = vsyncpa %s657, 1
    %659 = vsyncpa [#allocation4], 1
    %s660 = scalar_lea.sflag [#allocation4], 1
    %661 = vsyncpa %s660, 1
    %662 = vsyncpa [#allocation9], 1
    %s663 = scalar_lea.sflag [#allocation9], 1
    %664 = vsyncpa %s663, 1

</llo_original>
